<compile_context>
chip_gen: v6e
topology: v6e:2x2x1
jax: 0.10.0
libtpu: 0.0.40
codegen_flags: <defaults>
</compile_context>

<pallas_src>
import functools

import jax
import jax.numpy as jnp
from jax.experimental import pallas as pl
from jax.experimental.pallas import tpu as pltpu


EPS = 1e-5  # PyTorch nn.LayerNorm default


def _patch_merging_kernel(x_ref, wt_ref, wb_ref, bias_ref, o_ref):
    """Fused 2x2 merge + LayerNorm(4C) + Linear(4C->D, no bias) on one tile.

    x_ref    : (R, 2, W2, 2C)  R merged output rows; axis 1 is the h-offset
                               inside the 2x2 patch; last axis is (w, channel).
    wt/wb    : (2C, D)   gamma-scaled reduction-weight halves (h=0 / h=1 rows,
                         already permuted to kernel feature order).
    bias_ref : (1, D)    f32 bias = beta @ w_red (folded LayerNorm beta).
    o_ref    : (R*W2, D) output tokens (row-major over (R, W2)).
    """
    R, _, W2, C2 = x_ref.shape
    T = R * W2
    inv_n = 1.0 / (2 * C2)  # 1 / (4*C)

    # Top (h=0) / bottom (h=1) halves of every 2x2 patch as token matrices.
    # Leading-dim merge reshape is layout-preserving (no VMEM copy).
    top = x_ref[:, 0, :, :].reshape(T, C2).astype(jnp.float32)
    bot = x_ref[:, 1, :, :].reshape(T, C2).astype(jnp.float32)

    # Single-pass LayerNorm statistics over the full 4C features of each token.
    s1 = jnp.sum(top, axis=-1, keepdims=True) + jnp.sum(bot, axis=-1, keepdims=True)
    s2 = (jnp.sum(top * top, axis=-1, keepdims=True)
          + jnp.sum(bot * bot, axis=-1, keepdims=True))
    mean = s1 * inv_n
    var = s2 * inv_n - mean * mean
    rstd = jax.lax.rsqrt(var + EPS)          # EUP

    # Center + scale only; gamma/beta are folded into wt/wb/bias.
    tn = (top - mean) * rstd
    bn = (bot - mean) * rstd

    # Feed the MXU in the weight dtype (bf16 weights -> rated bf16 MXU path),
    # accumulate in f32.  Weights are never cast per grid step.
    acc = jnp.dot(tn.astype(wt_ref.dtype), wt_ref[...],
                  preferred_element_type=jnp.float32)
    acc = acc + jnp.dot(bn.astype(wb_ref.dtype), wb_ref[...],
                        preferred_element_type=jnp.float32)
    acc = acc + bias_ref[...]                # (1, D) broadcast, f32
    o_ref[...] = acc.astype(o_ref.dtype)


@functools.partial(jax.jit, static_argnames=("token_tile",))
def patch_merging_forward(x, gamma, beta, w_red, *, token_tile=1024):
    """PatchMerging forward.

    Args:
      x:      (B, H, W, C) channels-last input (H, W even).
      gamma:  (4C,) LayerNorm weight (PyTorch (w,h,c) feature order).
      beta:   (4C,) LayerNorm bias.
      w_red:  (4C, out_dim) reduction weight (x @ w_red == Linear(4C, out_dim)).
              Pass bf16 weights/activations for the fast MXU path.
      token_tile: target number of output tokens per grid step.
    Returns:
      (B, H//2, W//2, out_dim)
    """
    B, H, W, C = x.shape
    assert H % 2 == 0 and W % 2 == 0, "H and W must be even"
    H2, W2 = H // 2, W // 2
    C2, C4 = 2 * C, 4 * C
    assert gamma.shape == (C4,) and beta.shape == (C4,)
    assert w_red.shape[0] == C4
    D = w_red.shape[1]

    R = B * H2           # number of merged output rows
    N = R * W2           # number of output tokens

    # --- fold the PyTorch (w, h, c) feature permutation + LN affine ----------
    # PyTorch feature index f = w*2C + h*C + c; kernel half-feature k = w*C + c.
    g2 = gamma.astype(jnp.float32).reshape(2, 2, C)      # (w, h, c)
    b2 = beta.astype(jnp.float32).reshape(2, 2, C)
    w4 = w_red.astype(jnp.float32).reshape(2, 2, C, D)   # (w, h, c, D)
    w_top_f = w4[:, 0, :, :].reshape(C2, D)
    w_bot_f = w4[:, 1, :, :].reshape(C2, D)
    g_top = g2[:, 0, :].reshape(C2, 1)
    g_bot = g2[:, 1, :].reshape(C2, 1)
    b_top = b2[:, 0, :].reshape(1, C2)
    b_bot = b2[:, 1, :].reshape(1, C2)
    # gamma folded into the weight (kept in the original weight dtype)...
    w_top = (g_top * w_top_f).astype(w_red.dtype)
    w_bot = (g_bot * w_bot_f).astype(w_red.dtype)
    # ...and beta's contribution becomes a single f32 bias row.
    bias = (b_top @ w_top_f + b_bot @ w_bot_f).astype(jnp.float32)   # (1, D)

    # --- free (layout-preserving) reshape of the activations -----------------
    # (B, H, W, C) -> (B*H2, 2, W2, 2C): axis1 = h-offset, last axis = (w, c).
    x2 = x.reshape(R, 2, W2, C2)

    # --- tile sizing: ~token_tile tokens per grid step, clamped to VMEM ------
    elt = x.dtype.itemsize
    per_row_bytes = 2 * (2 * W2 * C2 * elt) + 2 * (W2 * D * elt)  # dbl-buffered
    budget = 24 << 20
    r_cap = max(1, budget // max(per_row_bytes, 1))
    r_tile = max(1, min(R, min(pl.cdiv(token_tile, W2), r_cap)))
    # Output block second-minor dim (r_tile*W2) must be a multiple of 8
    # (or equal the full extent N).
    while (r_tile * W2) % 8 != 0 and r_tile < R:
        r_tile += 1
    if (r_tile * W2) % 8 != 0:
        r_tile = R
    tok_blk = r_tile * W2
    grid = (pl.cdiv(R, r_tile),)

    # --- VMEM budget: double-buffered x/out tiles + single-buffered params ---
    need = (2 * (r_tile * 2 * W2 * C2 * elt)          # x blocks
            + 2 * (tok_blk * D * elt)                  # out blocks
            + 2 * C2 * D * w_red.dtype.itemsize        # weight halves (resident)
            + D * 4                                    # bias (resident)
            + (4 << 20))                               # headroom
    vmem_limit = int(min(max(need, 32 << 20), 60 << 20))

    # Note: for tiny out_dim (< 128 lanes, like the demo) the output stores are
    # masked partial vst's; real Swin sizes (out_dim >= 192) are lane-dense.
    vmem = pltpu.MemorySpace.VMEM
    out = pl.pallas_call(
        _patch_merging_kernel,
        out_shape=jax.ShapeDtypeStruct((N, D), x.dtype),
        grid_spec=pltpu.PrefetchScalarGridSpec(
            num_scalar_prefetch=0,
            grid=grid,
            in_specs=[
                pl.BlockSpec((r_tile, 2, W2, C2), lambda i: (i, 0, 0, 0)),
                pl.BlockSpec(memory_space=vmem),   # w_top (single-buffered)
                pl.BlockSpec(memory_space=vmem),   # w_bot
                pl.BlockSpec(memory_space=vmem),   # bias
            ],
            out_specs=pl.BlockSpec((tok_blk, D), lambda i: (i, 0)),
        ),
        compiler_params=pltpu.CompilerParams(
            dimension_semantics=("parallel",),
            vmem_limit_bytes=vmem_limit),
    )(x2, w_top, w_bot, bias)

    return out.reshape(B, H2, W2, D)


def _reference(x, gamma, beta, w_red):
    """Plain-JAX reference mirroring the PyTorch forward."""
    B, H, W, C = x.shape
    H2, W2 = H // 2, W // 2
    xm = x.reshape(B, H2, 2, W2, 2, C)
    xm = jnp.transpose(xm, (0, 1, 3, 4, 2, 5)).reshape(B, H2, W2, 4 * C)
    xf = xm.astype(jnp.float32)
    mean = jnp.mean(xf, axis=-1, keepdims=True)
    var = jnp.mean((xf - mean) ** 2, axis=-1, keepdims=True)
    xn = (xf - mean) * jax.lax.rsqrt(var + EPS) * gamma.astype(jnp.float32) \
        + beta.astype(jnp.float32)
    return (xn @ w_red.astype(jnp.float32)).astype(x.dtype)


if __name__ == "__main__":
    # Module config: dim = C = 4, out_dim defaults to 2*dim = 8.
    B, H, W, C = 2, 16, 16, 4
    dim = C
    out_dim = 2 * dim
    C4 = 4 * dim

    key = jax.random.PRNGKey(0)
    kx, kw, kg, kb = jax.random.split(key, 4)

    x = jax.random.normal(kx, (B, H, W, C), dtype=jnp.float32)

    # Deterministic parameter init (PyTorch defaults: LayerNorm gamma=1, beta=0).
    gamma = jnp.ones((C4,), dtype=jnp.float32)
    beta = jnp.zeros((C4,), dtype=jnp.float32)
    # nn.Linear(4*dim, out_dim, bias=False): weight (out_dim, 4*dim); store transposed.
    bound = 1.0 / (C4 ** 0.5)
    w_torch = jax.random.uniform(kw, (out_dim, C4), jnp.float32,
                                 minval=-bound, maxval=bound)
    w_red = w_torch.T  # (4C, out_dim)

    # float32 run — tight check against the PyTorch-equivalent reference.
    y = jax.block_until_ready(patch_merging_forward(x, gamma, beta, w_red))
    y_ref = _reference(x, gamma, beta, w_red)
    assert y.shape == (B, H // 2, W // 2, out_dim), y.shape
    assert jnp.allclose(y, y_ref, atol=1e-4, rtol=1e-4), (
        float(jnp.max(jnp.abs(y - y_ref))))

    # Non-trivial affine LayerNorm params (exercises the gamma/beta folding).
    gamma2 = 1.0 + 0.1 * jax.random.normal(kg, (C4,), jnp.float32)
    beta2 = 0.1 * jax.random.normal(kb, (C4,), jnp.float32)
    y2 = jax.block_until_ready(patch_merging_forward(x, gamma2, beta2, w_red))
    y2_ref = _reference(x, gamma2, beta2, w_red)
    assert jnp.allclose(y2, y2_ref, atol=1e-4, rtol=1e-4), (
        float(jnp.max(jnp.abs(y2 - y2_ref))))

    # bfloat16 run — exercises the rated bf16 MXU path (f32 accumulation).
    x_bf = x.astype(jnp.bfloat16)
    gamma_bf = gamma2.astype(jnp.bfloat16)
    beta_bf = beta2.astype(jnp.bfloat16)
    w_red_bf = w_red.astype(jnp.bfloat16)
    y_bf = jax.block_until_ready(
        patch_merging_forward(x_bf, gamma_bf, beta_bf, w_red_bf))
    y_bf_ref = _reference(x_bf, gamma_bf, beta_bf, w_red_bf)
    assert y_bf.shape == (B, H // 2, W // 2, out_dim), y_bf.shape
    assert jnp.allclose(y_bf.astype(jnp.float32), y_bf_ref.astype(jnp.float32),
                        atol=5e-2, rtol=5e-2), (
        float(jnp.max(jnp.abs(y_bf.astype(jnp.float32)
                              - y_bf_ref.astype(jnp.float32)))))

    print("KERNEL_OK")
</pallas_src>

<mosaic_0001>
module attributes {stable_mosaic.version = 11 : i64} {
  func.func @_patch_merging_kernel(%arg0: i32, %arg1: memref<16x2x8x8xf32, #tpu.memory_space<vmem>>, %arg2: memref<8x8xf32, #tpu.memory_space<vmem>>, %arg3: memref<8x8xf32, #tpu.memory_space<vmem>>, %arg4: memref<1x8xf32, #tpu.memory_space<vmem>>, %arg5: memref<128x8xf32, #tpu.memory_space<vmem>>) attributes {dimension_semantics = [#tpu.dimension_semantics<parallel>], iteration_bounds = array<i64: 1>, scalar_prefetch = 0 : i64, scratch_operands = 0 : i64, tpu.core_type = #tpu.core_type<tc>, window_params = [{transform_indices = @transform_0, window_bounds = array<i64: 16, 2, 8, 8>}, {pipeline_mode = #tpu.pipeline_mode<synchronous>, transform_indices = @transform_1, window_bounds = array<i64: 8, 8>}, {pipeline_mode = #tpu.pipeline_mode<synchronous>, transform_indices = @transform_2, window_bounds = array<i64: 8, 8>}, {pipeline_mode = #tpu.pipeline_mode<synchronous>, transform_indices = @transform_3, window_bounds = array<i64: 1, 8>}, {transform_indices = @transform_4, window_bounds = array<i64: 128, 8>}]} {
    %c0 = arith.constant 0 : index
    %c0_0 = arith.constant 0 : index
    %c0_1 = arith.constant 0 : index
    %c0_2 = arith.constant 0 : index
    %0 = vector.load %arg1[%c0, %c0_0, %c0_1, %c0_2] : memref<16x2x8x8xf32, #tpu.memory_space<vmem>>, vector<16x1x8x8xf32>
    %1 = vector.shape_cast %0 : vector<16x1x8x8xf32> to vector<16x8x8xf32>
    %2 = vector.shape_cast %1 : vector<16x8x8xf32> to vector<128x8xf32>
    %c0_3 = arith.constant 0 : index
    %c1 = arith.constant 1 : index
    %c0_4 = arith.constant 0 : index
    %c0_5 = arith.constant 0 : index
    %3 = vector.load %arg1[%c0_3, %c1, %c0_4, %c0_5] : memref<16x2x8x8xf32, #tpu.memory_space<vmem>>, vector<16x1x8x8xf32>
    %4 = vector.shape_cast %3 : vector<16x1x8x8xf32> to vector<16x8x8xf32>
    %5 = vector.shape_cast %4 : vector<16x8x8xf32> to vector<128x8xf32>
    %cst = arith.constant dense<0.000000e+00> : vector<128xf32>
    %6 = vector.multi_reduction <add>, %2, %cst [1] : vector<128x8xf32> to vector<128xf32>
    %7 = vector.shape_cast %6 : vector<128xf32> to vector<128x1xf32>
    %cst_6 = arith.constant dense<0.000000e+00> : vector<128xf32>
    %8 = vector.multi_reduction <add>, %5, %cst_6 [1] : vector<128x8xf32> to vector<128xf32>
    %9 = vector.shape_cast %8 : vector<128xf32> to vector<128x1xf32>
    %10 = arith.addf %7, %9 : vector<128x1xf32>
    %11 = arith.mulf %2, %2 : vector<128x8xf32>
    %cst_7 = arith.constant dense<0.000000e+00> : vector<128xf32>
    %12 = vector.multi_reduction <add>, %11, %cst_7 [1] : vector<128x8xf32> to vector<128xf32>
    %13 = vector.shape_cast %12 : vector<128xf32> to vector<128x1xf32>
    %14 = arith.mulf %5, %5 : vector<128x8xf32>
    %cst_8 = arith.constant dense<0.000000e+00> : vector<128xf32>
    %15 = vector.multi_reduction <add>, %14, %cst_8 [1] : vector<128x8xf32> to vector<128xf32>
    %16 = vector.shape_cast %15 : vector<128xf32> to vector<128x1xf32>
    %17 = arith.addf %13, %16 : vector<128x1xf32>
    %cst_9 = arith.constant 6.250000e-02 : f32
    %18 = vector.broadcast %cst_9 : f32 to vector<128x1xf32>
    %19 = arith.mulf %10, %18 : vector<128x1xf32>
    %cst_10 = arith.constant 6.250000e-02 : f32
    %20 = vector.broadcast %cst_10 : f32 to vector<128x1xf32>
    %21 = arith.mulf %17, %20 : vector<128x1xf32>
    %22 = arith.mulf %19, %19 : vector<128x1xf32>
    %23 = arith.subf %21, %22 : vector<128x1xf32>
    %cst_11 = arith.constant 9.99999974E-6 : f32
    %24 = vector.broadcast %cst_11 : f32 to vector<128x1xf32>
    %25 = arith.addf %23, %24 : vector<128x1xf32>
    %26 = math.rsqrt %25 : vector<128x1xf32>
    %27 = vector.broadcast %19 : vector<128x1xf32> to vector<128x8xf32>
    %28 = arith.subf %2, %27 : vector<128x8xf32>
    %29 = vector.broadcast %26 : vector<128x1xf32> to vector<128x8xf32>
    %30 = arith.mulf %28, %29 : vector<128x8xf32>
    %31 = vector.broadcast %19 : vector<128x1xf32> to vector<128x8xf32>
    %32 = arith.subf %5, %31 : vector<128x8xf32>
    %33 = vector.broadcast %26 : vector<128x1xf32> to vector<128x8xf32>
    %34 = arith.mulf %32, %33 : vector<128x8xf32>
    %c0_12 = arith.constant 0 : index
    %c0_13 = arith.constant 0 : index
    %35 = vector.load %arg2[%c0_12, %c0_13] : memref<8x8xf32, #tpu.memory_space<vmem>>, vector<8x8xf32>
    %cst_14 = arith.constant dense<0.000000e+00> : vector<128x8xf32>
    %36 = tpu.matmul %30, %35, %cst_14 {dimension_numbers = #tpu.dot_dimension_numbers<[1], [0], [0], [1], [0, 0, 1, 1], [], []>} : vector<128x8xf32>, vector<8x8xf32>, vector<128x8xf32> -> vector<128x8xf32>
    %c0_15 = arith.constant 0 : index
    %c0_16 = arith.constant 0 : index
    %37 = vector.load %arg3[%c0_15, %c0_16] : memref<8x8xf32, #tpu.memory_space<vmem>>, vector<8x8xf32>
    %cst_17 = arith.constant dense<0.000000e+00> : vector<128x8xf32>
    %38 = tpu.matmul %34, %37, %cst_17 {dimension_numbers = #tpu.dot_dimension_numbers<[1], [0], [0], [1], [0, 0, 1, 1], [], []>} : vector<128x8xf32>, vector<8x8xf32>, vector<128x8xf32> -> vector<128x8xf32>
    %39 = arith.addf %36, %38 : vector<128x8xf32>
    %c0_18 = arith.constant 0 : index
    %c0_19 = arith.constant 0 : index
    %40 = vector.load %arg4[%c0_18, %c0_19] : memref<1x8xf32, #tpu.memory_space<vmem>>, vector<1x8xf32>
    %41 = vector.broadcast %40 : vector<1x8xf32> to vector<128x8xf32>
    %42 = arith.addf %39, %41 : vector<128x8xf32>
    %c0_20 = arith.constant 0 : index
    %c0_21 = arith.constant 0 : index
    %43 = vector.load %arg5[%c0_20, %c0_21] : memref<128x8xf32, #tpu.memory_space<vmem>>, vector<128x8xf32>
    tpu.vector_store %arg5[%c0_20, %c0_21], %42 {strides = array<i32>} : memref<128x8xf32, #tpu.memory_space<vmem>>, vector<128x8xf32>,
    return
  }
  func.func @transform_0(%arg0: i32) -> (i32, i32, i32, i32) {
    %c0_i32 = arith.constant 0 : i32
    %c0_i32_0 = arith.constant 0 : i32
    %c0_i32_1 = arith.constant 0 : i32
    %c0_i32_2 = arith.constant 0 : i32
    return %arg0, %c0_i32, %c0_i32_0, %c0_i32_1 : i32, i32, i32, i32
  }
  func.func @transform_1(%arg0: i32) -> (i32, i32) {
    %c0_i32 = arith.constant 0 : i32
    %c0_i32_0 = arith.constant 0 : i32
    %c0_i32_1 = arith.constant 0 : i32
    return %c0_i32, %c0_i32_0 : i32, i32
  }
  func.func @transform_2(%arg0: i32) -> (i32, i32) {
    %c0_i32 = arith.constant 0 : i32
    %c0_i32_0 = arith.constant 0 : i32
    %c0_i32_1 = arith.constant 0 : i32
    return %c0_i32, %c0_i32_0 : i32, i32
  }
  func.func @transform_3(%arg0: i32) -> (i32, i32) {
    %c0_i32 = arith.constant 0 : i32
    %c0_i32_0 = arith.constant 0 : i32
    %c0_i32_1 = arith.constant 0 : i32
    return %c0_i32, %c0_i32_0 : i32, i32
  }
  func.func @transform_4(%arg0: i32) -> (i32, i32) {
    %c0_i32 = arith.constant 0 : i32
    %c0_i32_0 = arith.constant 0 : i32
    return %arg0, %c0_i32 : i32, i32
  }
}

</mosaic_0001>

<llo_original>
// kernel: patch_merging_forward.1
$region0: #{patch_merging_forward.1}
  #allocation0 [shape = 'u32[]', space=smem, size = 0x4, offset = 0x4, fixed_abs, tag = 'smem constant byte address 0x4 - core index']
  #allocation1 [shape = 'u32[144,128]{1,0:T(1,128)}', space=vmem, size = 0x12000, scoped, tag = 'internal scratch']
  %s0 = inlined_call_operand.vmem [shape: f32[16,2,8,8], index: 0, kind: input, shape index: {}]
  %s1 = inlined_call_operand.vmem [shape: f32[8,8], index: 1, kind: input, shape index: {}]
  %s2 = inlined_call_operand.vmem [shape: f32[8,8], index: 2, kind: input, shape index: {}]
  %s3 = inlined_call_operand.vmem [shape: f32[1,8], index: 3, kind: input, shape index: {}]
  %s4 = inlined_call_operand.hbm [shape: f32[128,8], index: 4, kind: output, shape index: {}]
  %s5 = sld [smem:[#allocation0]]
  $region26: #{patch_merging_forward.1} parent=0
    _
  %s7 = ssub.s32 1, %s5
  %s8 = scalar_select 0, %s7, %s5
  $region1: #{patch_merging_forward.1} parent=0
    #allocation2 [shape = 'u8[65536]{0}', space=vmem, size = 0x10000, scoped, tag = 'output window, operand 0, single buffered']
    #allocation3 [shape = 's32[1]{0}', space=sflag, size = 0x4, scoped, tag = 'scoped memory for patch_merging_forward.1']
    %9 = vsyncpa [#allocation3], 0
    // Predicated region
    $region2: #{patch_merging_forward.1} parent=1 // pred_check
      _
    $region3: #{patch_merging_forward.1} parent=1 // pred_check_branch
      %11 = sbr.rel (0) target = $region5
    $region4: #{patch_merging_forward.1} parent=1 // pred_region
      _
    $region5: #{patch_merging_forward.1} parent=1 // pred_fallthru
      _
    // Predicated region
    $region6: #{patch_merging_forward.1} parent=1 // pred_check
      _
    $region7: #{patch_merging_forward.1} parent=1 // pred_check_branch
      %13 = sbr.rel (0) target = $region9
    $region8: #{patch_merging_forward.1} parent=1 // pred_region
      _
    $region9: #{patch_merging_forward.1} parent=1 // pred_fallthru
      _
    // Predicated region
    $region10: #{patch_merging_forward.1} parent=1 // pred_check
      _
    $region11: #{patch_merging_forward.1} parent=1 // pred_check_branch
      %15 = sbr.rel (0) target = $region13
    $region12: #{patch_merging_forward.1} parent=1 // pred_region
      _
    $region13: #{patch_merging_forward.1} parent=1 // pred_fallthru
      _
    // Predicated region
    $region14: #{patch_merging_forward.1} parent=1 // pred_check
      _
    $region15: #{patch_merging_forward.1} parent=1 // pred_check_branch
      %17 = sbr.rel (0) target = $region17
    $region16: #{patch_merging_forward.1} parent=1 // pred_region
      _
    $region17: #{patch_merging_forward.1} parent=1 // pred_fallthru
      _
    %v18 = vld [vmem:[%s0] sm:$0xff]
    %v19 = vld [vmem:[%s0 + $0x10] sm:$0xff]
    %v20 = vld [vmem:[%s0 + $0x20] sm:$0xff]
    %v21 = vld [vmem:[%s0 + $0x30] sm:$0xff]
    %v22 = vld [vmem:[%s0 + $0x40] sm:$0xff]
    %v23 = vld [vmem:[%s0 + $0x50] sm:$0xff]
    %v24 = vld [vmem:[%s0 + $0x60] sm:$0xff]
    %v25 = vld [vmem:[%s0 + $0x70] sm:$0xff]
    %v26 = vld [vmem:[%s0 + $0x80] sm:$0xff]
    %v27 = vld [vmem:[%s0 + $0x90] sm:$0xff]
    %v28 = vld [vmem:[%s0 + $0xa0] sm:$0xff]
    %v29 = vld [vmem:[%s0 + $0xb0] sm:$0xff]
    %v30 = vld [vmem:[%s0 + $0xc0] sm:$0xff]
    %v31 = vld [vmem:[%s0 + $0xd0] sm:$0xff]
    %v32 = vld [vmem:[%s0 + $0xe0] sm:$0xff]
    %v33 = vld [vmem:[%s0 + $0xf0] sm:$0xff]
    %s34 = scalar_lea.vmem %s0, 8
    %v35 = vld [vmem:[%s34] sm:$0xff]
    %v36 = vld [vmem:[%s34 + $0x10] sm:$0xff]
    %v37 = vld [vmem:[%s34 + $0x20] sm:$0xff]
    %v38 = vld [vmem:[%s34 + $0x30] sm:$0xff]
    %v39 = vld [vmem:[%s34 + $0x40] sm:$0xff]
    %v40 = vld [vmem:[%s34 + $0x50] sm:$0xff]
    %v41 = vld [vmem:[%s34 + $0x60] sm:$0xff]
    %v42 = vld [vmem:[%s34 + $0x70] sm:$0xff]
    %v43 = vld [vmem:[%s34 + $0x80] sm:$0xff]
    %v44 = vld [vmem:[%s34 + $0x90] sm:$0xff]
    %v45 = vld [vmem:[%s34 + $0xa0] sm:$0xff]
    %v46 = vld [vmem:[%s34 + $0xb0] sm:$0xff]
    %v47 = vld [vmem:[%s34 + $0xc0] sm:$0xff]
    %v48 = vld [vmem:[%s34 + $0xd0] sm:$0xff]
    %v49 = vld [vmem:[%s34 + $0xe0] sm:$0xff]
    %v50 = vld [vmem:[%s34 + $0xf0] sm:$0xff]
    %vm51 = vcmask 64512
    %v52 = vsel %vm51, %v18, 0.0
    %53 = vadd.xlane.f32.xlu0 %v52
    %v54 = vpop.xlane.xlu0 %53
    %v55 = vsel %vm51, %v19, 0.0
    %56 = vadd.xlane.f32.xlu0 %v55
    %v57 = vpop.xlane.xlu0 %56
    %v58 = vsel %vm51, %v20, 0.0
    %59 = vadd.xlane.f32.xlu0 %v58
    %v60 = vpop.xlane.xlu0 %59
    %v61 = vsel %vm51, %v21, 0.0
    %62 = vadd.xlane.f32.xlu0 %v61
    %v63 = vpop.xlane.xlu0 %62
    %v64 = vsel %vm51, %v22, 0.0
    %65 = vadd.xlane.f32.xlu0 %v64
    %v66 = vpop.xlane.xlu0 %65
    %v67 = vsel %vm51, %v23, 0.0
    %68 = vadd.xlane.f32.xlu0 %v67
    %v69 = vpop.xlane.xlu0 %68
    %v70 = vsel %vm51, %v24, 0.0
    %71 = vadd.xlane.f32.xlu0 %v70
    %v72 = vpop.xlane.xlu0 %71
    %v73 = vsel %vm51, %v25, 0.0
    %74 = vadd.xlane.f32.xlu0 %v73
    %v75 = vpop.xlane.xlu0 %74
    %v76 = vsel %vm51, %v26, 0.0
    %77 = vadd.xlane.f32.xlu0 %v76
    %v78 = vpop.xlane.xlu0 %77
    %v79 = vsel %vm51, %v27, 0.0
    %80 = vadd.xlane.f32.xlu0 %v79
    %v81 = vpop.xlane.xlu0 %80
    %v82 = vsel %vm51, %v28, 0.0
    %83 = vadd.xlane.f32.xlu0 %v82
    %v84 = vpop.xlane.xlu0 %83
    %v85 = vsel %vm51, %v29, 0.0
    %86 = vadd.xlane.f32.xlu0 %v85
    %v87 = vpop.xlane.xlu0 %86
    %v88 = vsel %vm51, %v30, 0.0
    %89 = vadd.xlane.f32.xlu0 %v88
    %v90 = vpop.xlane.xlu0 %89
    %v91 = vsel %vm51, %v31, 0.0
    %92 = vadd.xlane.f32.xlu0 %v91
    %v93 = vpop.xlane.xlu0 %92
    %v94 = vsel %vm51, %v32, 0.0
    %95 = vadd.xlane.f32.xlu0 %v94
    %v96 = vpop.xlane.xlu0 %95
    %v97 = vsel %vm51, %v33, 0.0
    %98 = vadd.xlane.f32.xlu0 %v97
    %v99 = vpop.xlane.xlu0 %98
    %v100 = vsel %vm51, %v35, 0.0
    %101 = vadd.xlane.f32.xlu0 %v100
    %v102 = vpop.xlane.xlu0 %101
    %v103 = vsel %vm51, %v36, 0.0
    %104 = vadd.xlane.f32.xlu0 %v103
    %v105 = vpop.xlane.xlu0 %104
    %v106 = vsel %vm51, %v37, 0.0
    %107 = vadd.xlane.f32.xlu0 %v106
    %v108 = vpop.xlane.xlu0 %107
    %v109 = vsel %vm51, %v38, 0.0
    %110 = vadd.xlane.f32.xlu0 %v109
    %v111 = vpop.xlane.xlu0 %110
    %v112 = vsel %vm51, %v39, 0.0
    %113 = vadd.xlane.f32.xlu0 %v112
    %v114 = vpop.xlane.xlu0 %113
    %v115 = vsel %vm51, %v40, 0.0
    %116 = vadd.xlane.f32.xlu0 %v115
    %v117 = vpop.xlane.xlu0 %116
    %v118 = vsel %vm51, %v41, 0.0
    %119 = vadd.xlane.f32.xlu0 %v118
    %v120 = vpop.xlane.xlu0 %119
    %v121 = vsel %vm51, %v42, 0.0
    %122 = vadd.xlane.f32.xlu0 %v121
    %v123 = vpop.xlane.xlu0 %122
    %v124 = vsel %vm51, %v43, 0.0
    %125 = vadd.xlane.f32.xlu0 %v124
    %v126 = vpop.xlane.xlu0 %125
    %v127 = vsel %vm51, %v44, 0.0
    %128 = vadd.xlane.f32.xlu0 %v127
    %v129 = vpop.xlane.xlu0 %128
    %v130 = vsel %vm51, %v45, 0.0
    %131 = vadd.xlane.f32.xlu0 %v130
    %v132 = vpop.xlane.xlu0 %131
    %v133 = vsel %vm51, %v46, 0.0
    %134 = vadd.xlane.f32.xlu0 %v133
    %v135 = vpop.xlane.xlu0 %134
    %v136 = vsel %vm51, %v47, 0.0
    %137 = vadd.xlane.f32.xlu0 %v136
    %v138 = vpop.xlane.xlu0 %137
    %v139 = vsel %vm51, %v48, 0.0
    %140 = vadd.xlane.f32.xlu0 %v139
    %v141 = vpop.xlane.xlu0 %140
    %v142 = vsel %vm51, %v49, 0.0
    %143 = vadd.xlane.f32.xlu0 %v142
    %v144 = vpop.xlane.xlu0 %143
    %v145 = vsel %vm51, %v50, 0.0
    %146 = vadd.xlane.f32.xlu0 %v145
    %v147 = vpop.xlane.xlu0 %146
    %v148 = vadd.f32 %v54, %v102
    %v149 = vadd.f32 %v57, %v105
    %v150 = vadd.f32 %v60, %v108
    %v151 = vadd.f32 %v63, %v111
    %v152 = vadd.f32 %v66, %v114
    %v153 = vadd.f32 %v69, %v117
    %v154 = vadd.f32 %v72, %v120
    %v155 = vadd.f32 %v75, %v123
    %v156 = vadd.f32 %v78, %v126
    %v157 = vadd.f32 %v81, %v129
    %v158 = vadd.f32 %v84, %v132
    %v159 = vadd.f32 %v87, %v135
    %v160 = vadd.f32 %v90, %v138
    %v161 = vadd.f32 %v93, %v141
    %v162 = vadd.f32 %v96, %v144
    %v163 = vadd.f32 %v99, %v147
    %v164 = vmul.f32 %v18, %v18
    %v165 = vmul.f32 %v19, %v19
    %v166 = vmul.f32 %v20, %v20
    %v167 = vmul.f32 %v21, %v21
    %v168 = vmul.f32 %v22, %v22
    %v169 = vmul.f32 %v23, %v23
    %v170 = vmul.f32 %v24, %v24
    %v171 = vmul.f32 %v25, %v25
    %v172 = vmul.f32 %v26, %v26
    %v173 = vmul.f32 %v27, %v27
    %v174 = vmul.f32 %v28, %v28
    %v175 = vmul.f32 %v29, %v29
    %v176 = vmul.f32 %v30, %v30
    %v177 = vmul.f32 %v31, %v31
    %v178 = vmul.f32 %v32, %v32
    %v179 = vmul.f32 %v33, %v33
    %v180 = vsel %vm51, %v164, 0.0
    %181 = vadd.xlane.f32.xlu0 %v180
    %v182 = vpop.xlane.xlu0 %181
    %v183 = vsel %vm51, %v165, 0.0
    %184 = vadd.xlane.f32.xlu0 %v183
    %v185 = vpop.xlane.xlu0 %184
    %v186 = vsel %vm51, %v166, 0.0
    %187 = vadd.xlane.f32.xlu0 %v186
    %v188 = vpop.xlane.xlu0 %187
    %v189 = vsel %vm51, %v167, 0.0
    %190 = vadd.xlane.f32.xlu0 %v189
    %v191 = vpop.xlane.xlu0 %190
    %v192 = vsel %vm51, %v168, 0.0
    %193 = vadd.xlane.f32.xlu0 %v192
    %v194 = vpop.xlane.xlu0 %193
    %v195 = vsel %vm51, %v169, 0.0
    %196 = vadd.xlane.f32.xlu0 %v195
    %v197 = vpop.xlane.xlu0 %196
    %v198 = vsel %vm51, %v170, 0.0
    %199 = vadd.xlane.f32.xlu0 %v198
    %v200 = vpop.xlane.xlu0 %199
    %v201 = vsel %vm51, %v171, 0.0
    %202 = vadd.xlane.f32.xlu0 %v201
    %v203 = vpop.xlane.xlu0 %202
    %v204 = vsel %vm51, %v172, 0.0
    %205 = vadd.xlane.f32.xlu0 %v204
    %v206 = vpop.xlane.xlu0 %205
    %v207 = vsel %vm51, %v173, 0.0
    %208 = vadd.xlane.f32.xlu0 %v207
    %v209 = vpop.xlane.xlu0 %208
    %v210 = vsel %vm51, %v174, 0.0
    %211 = vadd.xlane.f32.xlu0 %v210
    %v212 = vpop.xlane.xlu0 %211
    %v213 = vsel %vm51, %v175, 0.0
    %214 = vadd.xlane.f32.xlu0 %v213
    %v215 = vpop.xlane.xlu0 %214
    %v216 = vsel %vm51, %v176, 0.0
    %217 = vadd.xlane.f32.xlu0 %v216
    %v218 = vpop.xlane.xlu0 %217
    %v219 = vsel %vm51, %v177, 0.0
    %220 = vadd.xlane.f32.xlu0 %v219
    %v221 = vpop.xlane.xlu0 %220
    %v222 = vsel %vm51, %v178, 0.0
    %223 = vadd.xlane.f32.xlu0 %v222
    %v224 = vpop.xlane.xlu0 %223
    %v225 = vsel %vm51, %v179, 0.0
    %226 = vadd.xlane.f32.xlu0 %v225
    %v227 = vpop.xlane.xlu0 %226
    %v228 = vmul.f32 %v35, %v35
    %v229 = vmul.f32 %v36, %v36
    %v230 = vmul.f32 %v37, %v37
    %v231 = vmul.f32 %v38, %v38
    %v232 = vmul.f32 %v39, %v39
    %v233 = vmul.f32 %v40, %v40
    %v234 = vmul.f32 %v41, %v41
    %v235 = vmul.f32 %v42, %v42
    %v236 = vmul.f32 %v43, %v43
    %v237 = vmul.f32 %v44, %v44
    %v238 = vmul.f32 %v45, %v45
    %v239 = vmul.f32 %v46, %v46
    %v240 = vmul.f32 %v47, %v47
    %v241 = vmul.f32 %v48, %v48
    %v242 = vmul.f32 %v49, %v49
    %v243 = vmul.f32 %v50, %v50
    %v244 = vsel %vm51, %v228, 0.0
    %245 = vadd.xlane.f32.xlu0 %v244
    %v246 = vpop.xlane.xlu0 %245
    %v247 = vsel %vm51, %v229, 0.0
    %248 = vadd.xlane.f32.xlu0 %v247
    %v249 = vpop.xlane.xlu0 %248
    %v250 = vsel %vm51, %v230, 0.0
    %251 = vadd.xlane.f32.xlu0 %v250
    %v252 = vpop.xlane.xlu0 %251
    %v253 = vsel %vm51, %v231, 0.0
    %254 = vadd.xlane.f32.xlu0 %v253
    %v255 = vpop.xlane.xlu0 %254
    %v256 = vsel %vm51, %v232, 0.0
    %257 = vadd.xlane.f32.xlu0 %v256
    %v258 = vpop.xlane.xlu0 %257
    %v259 = vsel %vm51, %v233, 0.0
    %260 = vadd.xlane.f32.xlu0 %v259
    %v261 = vpop.xlane.xlu0 %260
    %v262 = vsel %vm51, %v234, 0.0
    %263 = vadd.xlane.f32.xlu0 %v262
    %v264 = vpop.xlane.xlu0 %263
    %v265 = vsel %vm51, %v235, 0.0
    %266 = vadd.xlane.f32.xlu0 %v265
    %v267 = vpop.xlane.xlu0 %266
    %v268 = vsel %vm51, %v236, 0.0
    %269 = vadd.xlane.f32.xlu0 %v268
    %v270 = vpop.xlane.xlu0 %269
    %v271 = vsel %vm51, %v237, 0.0
    %272 = vadd.xlane.f32.xlu0 %v271
    %v273 = vpop.xlane.xlu0 %272
    %v274 = vsel %vm51, %v238, 0.0
    %275 = vadd.xlane.f32.xlu0 %v274
    %v276 = vpop.xlane.xlu0 %275
    %v277 = vsel %vm51, %v239, 0.0
    %278 = vadd.xlane.f32.xlu0 %v277
    %v279 = vpop.xlane.xlu0 %278
    %v280 = vsel %vm51, %v240, 0.0
    %281 = vadd.xlane.f32.xlu0 %v280
    %v282 = vpop.xlane.xlu0 %281
    %v283 = vsel %vm51, %v241, 0.0
    %284 = vadd.xlane.f32.xlu0 %v283
    %v285 = vpop.xlane.xlu0 %284
    %v286 = vsel %vm51, %v242, 0.0
    %287 = vadd.xlane.f32.xlu0 %v286
    %v288 = vpop.xlane.xlu0 %287
    %v289 = vsel %vm51, %v243, 0.0
    %290 = vadd.xlane.f32.xlu0 %v289
    %v291 = vpop.xlane.xlu0 %290
    %v292 = vadd.f32 %v182, %v246
    %v293 = vadd.f32 %v185, %v249
    %v294 = vadd.f32 %v188, %v252
    %v295 = vadd.f32 %v191, %v255
    %v296 = vadd.f32 %v194, %v258
    %v297 = vadd.f32 %v197, %v261
    %v298 = vadd.f32 %v200, %v264
    %v299 = vadd.f32 %v203, %v267
    %v300 = vadd.f32 %v206, %v270
    %v301 = vadd.f32 %v209, %v273
    %v302 = vadd.f32 %v212, %v276
    %v303 = vadd.f32 %v215, %v279
    %v304 = vadd.f32 %v218, %v282
    %v305 = vadd.f32 %v221, %v285
    %v306 = vadd.f32 %v224, %v288
    %v307 = vadd.f32 %v227, %v291
    %v308 = vmul.f32 %v148, 0.0625
    %v309 = vmul.f32 %v149, 0.0625
    %v310 = vmul.f32 %v150, 0.0625
    %v311 = vmul.f32 %v151, 0.0625
    %v312 = vmul.f32 %v152, 0.0625
    %v313 = vmul.f32 %v153, 0.0625
    %v314 = vmul.f32 %v154, 0.0625
    %v315 = vmul.f32 %v155, 0.0625
    %v316 = vmul.f32 %v156, 0.0625
    %v317 = vmul.f32 %v157, 0.0625
    %v318 = vmul.f32 %v158, 0.0625
    %v319 = vmul.f32 %v159, 0.0625
    %v320 = vmul.f32 %v160, 0.0625
    %v321 = vmul.f32 %v161, 0.0625
    %v322 = vmul.f32 %v162, 0.0625
    %v323 = vmul.f32 %v163, 0.0625
    %v324 = vmul.f32 %v292, 0.0625
    %v325 = vmul.f32 %v293, 0.0625
    %v326 = vmul.f32 %v294, 0.0625
    %v327 = vmul.f32 %v295, 0.0625
    %v328 = vmul.f32 %v296, 0.0625
    %v329 = vmul.f32 %v297, 0.0625
    %v330 = vmul.f32 %v298, 0.0625
    %v331 = vmul.f32 %v299, 0.0625
    %v332 = vmul.f32 %v300, 0.0625
    %v333 = vmul.f32 %v301, 0.0625
    %v334 = vmul.f32 %v302, 0.0625
    %v335 = vmul.f32 %v303, 0.0625
    %v336 = vmul.f32 %v304, 0.0625
    %v337 = vmul.f32 %v305, 0.0625
    %v338 = vmul.f32 %v306, 0.0625
    %v339 = vmul.f32 %v307, 0.0625
    %v340 = vmul.f32 %v308, %v308
    %v341 = vmul.f32 %v309, %v309
    %v342 = vmul.f32 %v310, %v310
    %v343 = vmul.f32 %v311, %v311
    %v344 = vmul.f32 %v312, %v312
    %v345 = vmul.f32 %v313, %v313
    %v346 = vmul.f32 %v314, %v314
    %v347 = vmul.f32 %v315, %v315
    %v348 = vmul.f32 %v316, %v316
    %v349 = vmul.f32 %v317, %v317
    %v350 = vmul.f32 %v318, %v318
    %v351 = vmul.f32 %v319, %v319
    %v352 = vmul.f32 %v320, %v320
    %v353 = vmul.f32 %v321, %v321
    %v354 = vmul.f32 %v322, %v322
    %v355 = vmul.f32 %v323, %v323
    %v356 = vsub.f32 %v324, %v340
    %v357 = vsub.f32 %v325, %v341
    %v358 = vsub.f32 %v326, %v342
    %v359 = vsub.f32 %v327, %v343
    %v360 = vsub.f32 %v328, %v344
    %v361 = vsub.f32 %v329, %v345
    %v362 = vsub.f32 %v330, %v346
    %v363 = vsub.f32 %v331, %v347
    %v364 = vsub.f32 %v332, %v348
    %v365 = vsub.f32 %v333, %v349
    %v366 = vsub.f32 %v334, %v350
    %v367 = vsub.f32 %v335, %v351
    %v368 = vsub.f32 %v336, %v352
    %v369 = vsub.f32 %v337, %v353
    %v370 = vsub.f32 %v338, %v354
    %v371 = vsub.f32 %v339, %v355
    %v372 = vadd.f32 %v356, 1e-05
    %v373 = vadd.f32 %v357, 1e-05
    %v374 = vadd.f32 %v358, 1e-05
    %v375 = vadd.f32 %v359, 1e-05
    %v376 = vadd.f32 %v360, 1e-05
    %v377 = vadd.f32 %v361, 1e-05
    %v378 = vadd.f32 %v362, 1e-05
    %v379 = vadd.f32 %v363, 1e-05
    %v380 = vadd.f32 %v364, 1e-05
    %v381 = vadd.f32 %v365, 1e-05
    %v382 = vadd.f32 %v366, 1e-05
    %v383 = vadd.f32 %v367, 1e-05
    %v384 = vadd.f32 %v368, 1e-05
    %v385 = vadd.f32 %v369, 1e-05
    %v386 = vadd.f32 %v370, 1e-05
    %v387 = vadd.f32 %v371, 1e-05
    %v388 = vrsqrt.pop %v372
    %v389 = vrsqrt.pop %v373
    %v390 = vrsqrt.pop %v374
    %v391 = vrsqrt.pop %v375
    %v392 = vrsqrt.pop %v376
    %v393 = vrsqrt.pop %v377
    %v394 = vrsqrt.pop %v378
    %v395 = vrsqrt.pop %v379
    %v396 = vrsqrt.pop %v380
    %v397 = vrsqrt.pop %v381
    %v398 = vrsqrt.pop %v382
    %v399 = vrsqrt.pop %v383
    %v400 = vrsqrt.pop %v384
    %v401 = vrsqrt.pop %v385
    %v402 = vrsqrt.pop %v386
    %v403 = vrsqrt.pop %v387
    %v404 = vsub.f32 %v18, %v308
    %v405 = vsub.f32 %v19, %v309
    %v406 = vsub.f32 %v20, %v310
    %v407 = vsub.f32 %v21, %v311
    %v408 = vsub.f32 %v22, %v312
    %v409 = vsub.f32 %v23, %v313
    %v410 = vsub.f32 %v24, %v314
    %v411 = vsub.f32 %v25, %v315
    %v412 = vsub.f32 %v26, %v316
    %v413 = vsub.f32 %v27, %v317
    %v414 = vsub.f32 %v28, %v318
    %v415 = vsub.f32 %v29, %v319
    %v416 = vsub.f32 %v30, %v320
    %v417 = vsub.f32 %v31, %v321
    %v418 = vsub.f32 %v32, %v322
    %v419 = vsub.f32 %v33, %v323
    %v420 = vmul.f32 %v404, %v388
    %v421 = vmul.f32 %v405, %v389
    %v422 = vmul.f32 %v406, %v390
    %v423 = vmul.f32 %v407, %v391
    %v424 = vmul.f32 %v408, %v392
    %v425 = vmul.f32 %v409, %v393
    %v426 = vmul.f32 %v410, %v394
    %v427 = vmul.f32 %v411, %v395
    %v428 = vmul.f32 %v412, %v396
    %v429 = vmul.f32 %v413, %v397
    %v430 = vmul.f32 %v414, %v398
    %v431 = vmul.f32 %v415, %v399
    %v432 = vmul.f32 %v416, %v400
    %v433 = vmul.f32 %v417, %v401
    %v434 = vmul.f32 %v418, %v402
    %v435 = vmul.f32 %v419, %v403
    %v436 = vsub.f32 %v35, %v308
    %v437 = vsub.f32 %v36, %v309
    %v438 = vsub.f32 %v37, %v310
    %v439 = vsub.f32 %v38, %v311
    %v440 = vsub.f32 %v39, %v312
    %v441 = vsub.f32 %v40, %v313
    %v442 = vsub.f32 %v41, %v314
    %v443 = vsub.f32 %v42, %v315
    %v444 = vsub.f32 %v43, %v316
    %v445 = vsub.f32 %v44, %v317
    %v446 = vsub.f32 %v45, %v318
    %v447 = vsub.f32 %v46, %v319
    %v448 = vsub.f32 %v47, %v320
    %v449 = vsub.f32 %v48, %v321
    %v450 = vsub.f32 %v49, %v322
    %v451 = vsub.f32 %v50, %v323
    %v452 = vmul.f32 %v436, %v388
    %v453 = vmul.f32 %v437, %v389
    %v454 = vmul.f32 %v438, %v390
    %v455 = vmul.f32 %v439, %v391
    %v456 = vmul.f32 %v440, %v392
    %v457 = vmul.f32 %v441, %v393
    %v458 = vmul.f32 %v442, %v394
    %v459 = vmul.f32 %v443, %v395
    %v460 = vmul.f32 %v444, %v396
    %v461 = vmul.f32 %v445, %v397
    %v462 = vmul.f32 %v446, %v398
    %v463 = vmul.f32 %v447, %v399
    %v464 = vmul.f32 %v448, %v400
    %v465 = vmul.f32 %v449, %v401
    %v466 = vmul.f32 %v450, %v402
    %v467 = vmul.f32 %v451, %v403
    %v468 = vld [vmem:[%s1] sm:$0xff]
    %v469 = vld [vmem:[%s2] sm:$0xff]
    %v471 = vsel %vm51, %v452, 0
    %v474 = vsel %vm51, %v453, 0
    %v477 = vsel %vm51, %v454, 0
    %v480 = vsel %vm51, %v455, 0
    %v483 = vsel %vm51, %v456, 0
    %v486 = vsel %vm51, %v457, 0
    %v489 = vsel %vm51, %v458, 0
    %v492 = vsel %vm51, %v459, 0
    %v495 = vsel %vm51, %v460, 0
    %v498 = vsel %vm51, %v461, 0
    %v501 = vsel %vm51, %v462, 0
    %v504 = vsel %vm51, %v463, 0
    %v507 = vsel %vm51, %v464, 0
    %v510 = vsel %vm51, %v465, 0
    %v513 = vsel %vm51, %v466, 0
    %v516 = vsel %vm51, %v467, 0
    %518 = vmatprep.subr.mxu0 0.0
    %519 = vmatpush1.msra.mxu0 0.0
    %520 = vmatprep.subr.mxu0 0.0
    %521 = vmatpush1.msra.mxu0 0.0
    %522 = vmatprep.subr.mxu0 0.0
    %523 = vmatpush1.msra.mxu0 0.0
    %524 = vmatprep.subr.mxu0 0.0
    %525 = vmatpush1.msra.mxu0 0.0
    %526 = vmatprep.subr.mxu0 0.0
    %527 = vmatpush1.msra.mxu0 0.0
    %528 = vmatprep.subr.mxu0 0.0
    %529 = vmatpush1.msra.mxu0 0.0
    %530 = vmatprep.subr.mxu0 0.0
    %531 = vmatpush1.msra.mxu0 0.0
    %532 = vmatprep.subr.mxu0 0.0
    %533 = vmatpush1.msra.mxu0 0.0
    %534 = vmatprep.subr.mxu0 0.0
    %535 = vmatpush1.msra.mxu0 0.0
    %536 = vmatprep.subr.mxu0 0.0
    %537 = vmatpush1.msra.mxu0 0.0
    %538 = vmatprep.subr.mxu0 0.0
    %539 = vmatpush1.msra.mxu0 0.0
    %540 = vmatprep.subr.mxu0 0.0
    %541 = vmatpush1.msra.mxu0 0.0
    %542 = vmatprep.subr.mxu0 0.0
    %543 = vmatpush1.msra.mxu0 0.0
    %544 = vmatprep.subr.mxu0 0.0
    %545 = vmatpush1.msra.mxu0 0.0
    %546 = vmatprep.subr.mxu0 0.0
    %547 = vmatpush1.msra.mxu0 0.0
    %548 = vmatprep.subr.mxu0 0.0
    %549 = vmatpush1.msra.mxu0 %v469
    %550 = vmatprep.subr.mxu0 0.0
    %551 = vmatpush2.msra.mxu0 0.0
    %552 = vmatprep.subr.mxu0 0.0
    %553 = vmatpush2.msra.mxu0 0.0
    %554 = vmatprep.subr.mxu0 0.0
    %555 = vmatpush2.msra.mxu0 0.0
    %556 = vmatprep.subr.mxu0 0.0
    %557 = vmatpush2.msra.mxu0 0.0
    %558 = vmatprep.subr.mxu0 0.0
    %559 = vmatpush2.msra.mxu0 0.0
    %560 = vmatprep.subr.mxu0 0.0
    %561 = vmatpush2.msra.mxu0 0.0
    %562 = vmatprep.subr.mxu0 0.0
    %563 = vmatpush2.msra.mxu0 0.0
    %564 = vmatprep.subr.mxu0 0.0
    %565 = vmatpush2.msra.mxu0 0.0
    %566 = vmatprep.subr.mxu0 0.0
    %567 = vmatpush2.msra.mxu0 0.0
    %568 = vmatprep.subr.mxu0 0.0
    %569 = vmatpush2.msra.mxu0 0.0
    %570 = vmatprep.subr.mxu0 0.0
    %571 = vmatpush2.msra.mxu0 0.0
    %572 = vmatprep.subr.mxu0 0.0
    %573 = vmatpush2.msra.mxu0 0.0
    %574 = vmatprep.subr.mxu0 0.0
    %575 = vmatpush2.msra.mxu0 0.0
    %576 = vmatprep.subr.mxu0 0.0
    %577 = vmatpush2.msra.mxu0 0.0
    %578 = vmatprep.subr.mxu0 0.0
    %579 = vmatpush2.msra.mxu0 0.0
    %580 = vmatprep.subr.mxu0 0.0
    %581 = vmatpush2.msra.mxu0 0.0
    %582 = vmatprep.mubr.f32.mxu0 0.0
    %583 = vmatmul.mubr.f32.gmra.mxu0 %v471
    %v584 = vpop.f32.mrf.mxu0
    %v585 = vadd.f32 0.0, %v584
    %v586 = vpop.f32.mrf.mxu0
    %587 = vmatprep.mubr.f32.mxu0 0.0
    %588 = vmatmul.mubr.f32.gmra.mxu0 %v474
    %v589 = vpop.f32.mrf.mxu0
    %v590 = vadd.f32 0.0, %v589
    %v591 = vpop.f32.mrf.mxu0
    %592 = vmatprep.mubr.f32.mxu0 0.0
    %593 = vmatmul.mubr.f32.gmra.mxu0 %v477
    %v594 = vpop.f32.mrf.mxu0
    %v595 = vadd.f32 0.0, %v594
    %v596 = vpop.f32.mrf.mxu0
    %597 = vmatprep.mubr.f32.mxu0 0.0
    %598 = vmatmul.mubr.f32.gmra.mxu0 %v480
    %v599 = vpop.f32.mrf.mxu0
    %v600 = vadd.f32 0.0, %v599
    %v601 = vpop.f32.mrf.mxu0
    %602 = vmatprep.mubr.f32.mxu0 0.0
    %603 = vmatmul.mubr.f32.gmra.mxu0 %v483
    %v604 = vpop.f32.mrf.mxu0
    %v605 = vadd.f32 0.0, %v604
    %v606 = vpop.f32.mrf.mxu0
    %607 = vmatprep.mubr.f32.mxu0 0.0
    %608 = vmatmul.mubr.f32.gmra.mxu0 %v486
    %v609 = vpop.f32.mrf.mxu0
    %v610 = vadd.f32 0.0, %v609
    %v611 = vpop.f32.mrf.mxu0
    %612 = vmatprep.mubr.f32.mxu0 0.0
    %613 = vmatmul.mubr.f32.gmra.mxu0 %v489
    %v614 = vpop.f32.mrf.mxu0
    %v615 = vadd.f32 0.0, %v614
    %v616 = vpop.f32.mrf.mxu0
    %617 = vmatprep.mubr.f32.mxu0 0.0
    %618 = vmatmul.mubr.f32.gmra.mxu0 %v492
    %v619 = vpop.f32.mrf.mxu0
    %v620 = vadd.f32 0.0, %v619
    %v621 = vpop.f32.mrf.mxu0
    %622 = vmatprep.mubr.f32.mxu0 0.0
    %623 = vmatmul.mubr.f32.gmra.mxu0 %v495
    %v624 = vpop.f32.mrf.mxu0
    %v625 = vadd.f32 0.0, %v624
    %v626 = vpop.f32.mrf.mxu0
    %627 = vmatprep.mubr.f32.mxu0 0.0
    %628 = vmatmul.mubr.f32.gmra.mxu0 %v498
    %v629 = vpop.f32.mrf.mxu0
    %v630 = vadd.f32 0.0, %v629
    %v631 = vpop.f32.mrf.mxu0
    %632 = vmatprep.mubr.f32.mxu0 0.0
    %633 = vmatmul.mubr.f32.gmra.mxu0 %v501
    %v634 = vpop.f32.mrf.mxu0
    %v635 = vadd.f32 0.0, %v634
    %v636 = vpop.f32.mrf.mxu0
    %637 = vmatprep.mubr.f32.mxu0 0.0
    %638 = vmatmul.mubr.f32.gmra.mxu0 %v504
    %v639 = vpop.f32.mrf.mxu0
    %v640 = vadd.f32 0.0, %v639
    %v641 = vpop.f32.mrf.mxu0
    %642 = vmatprep.mubr.f32.mxu0 0.0
    %643 = vmatmul.mubr.f32.gmra.mxu0 %v507
    %v644 = vpop.f32.mrf.mxu0
    %v645 = vadd.f32 0.0, %v644
    %v646 = vpop.f32.mrf.mxu0
    %647 = vmatprep.mubr.f32.mxu0 0.0
    %648 = vmatmul.mubr.f32.gmra.mxu0 %v510
    %v649 = vpop.f32.mrf.mxu0
    %v650 = vadd.f32 0.0, %v649
    %v651 = vpop.f32.mrf.mxu0
    %652 = vmatprep.mubr.f32.mxu0 0.0
    %653 = vmatmul.mubr.f32.gmra.mxu0 %v513
    %v654 = vpop.f32.mrf.mxu0
    %v655 = vadd.f32 0.0, %v654
    %v656 = vpop.f32.mrf.mxu0
    %657 = vmatprep.mubr.f32.mxu0 0.0
    %658 = vmatmul.mubr.f32.gmra.mxu0 %v516
    %v659 = vpop.f32.mrf.mxu0
    %v660 = vadd.f32 0.0, %v659
    %v661 = vpop.f32.mrf.mxu0
    %662 = vdwg.mxu0
    %v664 = vsel %vm51, %v420, 0
    %v667 = vsel %vm51, %v421, 0
    %v670 = vsel %vm51, %v422, 0
    %v673 = vsel %vm51, %v423, 0
    %v676 = vsel %vm51, %v424, 0
    %v679 = vsel %vm51, %v425, 0
    %v682 = vsel %vm51, %v426, 0
    %v685 = vsel %vm51, %v427, 0
    %v688 = vsel %vm51, %v428, 0
    %v691 = vsel %vm51, %v429, 0
    %v694 = vsel %vm51, %v430, 0
    %v697 = vsel %vm51, %v431, 0
    %v700 = vsel %vm51, %v432, 0
    %v703 = vsel %vm51, %v433, 0
    %v706 = vsel %vm51, %v434, 0
    %v709 = vsel %vm51, %v435, 0
    %711 = vmatprep.subr.mxu0 0.0
    %712 = vmatpush1.msra.mxu0 0.0
    %713 = vmatprep.subr.mxu0 0.0
    %714 = vmatpush1.msra.mxu0 0.0
    %715 = vmatprep.subr.mxu0 0.0
    %716 = vmatpush1.msra.mxu0 0.0
    %717 = vmatprep.subr.mxu0 0.0
    %718 = vmatpush1.msra.mxu0 0.0
    %719 = vmatprep.subr.mxu0 0.0
    %720 = vmatpush1.msra.mxu0 0.0
    %721 = vmatprep.subr.mxu0 0.0
    %722 = vmatpush1.msra.mxu0 0.0
    %723 = vmatprep.subr.mxu0 0.0
    %724 = vmatpush1.msra.mxu0 0.0
    %725 = vmatprep.subr.mxu0 0.0
    %726 = vmatpush1.msra.mxu0 0.0
    %727 = vmatprep.subr.mxu0 0.0
    %728 = vmatpush1.msra.mxu0 0.0
    %729 = vmatprep.subr.mxu0 0.0
    %730 = vmatpush1.msra.mxu0 0.0
    %731 = vmatprep.subr.mxu0 0.0
    %732 = vmatpush1.msra.mxu0 0.0
    %733 = vmatprep.subr.mxu0 0.0
    %734 = vmatpush1.msra.mxu0 0.0
    %735 = vmatprep.subr.mxu0 0.0
    %736 = vmatpush1.msra.mxu0 0.0
    %737 = vmatprep.subr.mxu0 0.0
    %738 = vmatpush1.msra.mxu0 0.0
    %739 = vmatprep.subr.mxu0 0.0
    %740 = vmatpush1.msra.mxu0 0.0
    %741 = vmatprep.subr.mxu0 0.0
    %742 = vmatpush1.msra.mxu0 %v468
    %743 = vmatprep.subr.mxu0 0.0
    %744 = vmatpush2.msra.mxu0 0.0
    %745 = vmatprep.subr.mxu0 0.0
    %746 = vmatpush2.msra.mxu0 0.0
    %747 = vmatprep.subr.mxu0 0.0
    %748 = vmatpush2.msra.mxu0 0.0
    %749 = vmatprep.subr.mxu0 0.0
    %750 = vmatpush2.msra.mxu0 0.0
    %751 = vmatprep.subr.mxu0 0.0
    %752 = vmatpush2.msra.mxu0 0.0
    %753 = vmatprep.subr.mxu0 0.0
    %754 = vmatpush2.msra.mxu0 0.0
    %755 = vmatprep.subr.mxu0 0.0
    %756 = vmatpush2.msra.mxu0 0.0
    %757 = vmatprep.subr.mxu0 0.0
    %758 = vmatpush2.msra.mxu0 0.0
    %759 = vmatprep.subr.mxu0 0.0
    %760 = vmatpush2.msra.mxu0 0.0
    %761 = vmatprep.subr.mxu0 0.0
    %762 = vmatpush2.msra.mxu0 0.0
    %763 = vmatprep.subr.mxu0 0.0
    %764 = vmatpush2.msra.mxu0 0.0
    %765 = vmatprep.subr.mxu0 0.0
    %766 = vmatpush2.msra.mxu0 0.0
    %767 = vmatprep.subr.mxu0 0.0
    %768 = vmatpush2.msra.mxu0 0.0
    %769 = vmatprep.subr.mxu0 0.0
    %770 = vmatpush2.msra.mxu0 0.0
    %771 = vmatprep.subr.mxu0 0.0
    %772 = vmatpush2.msra.mxu0 0.0
    %773 = vmatprep.subr.mxu0 0.0
    %774 = vmatpush2.msra.mxu0 0.0
    %775 = vmatprep.mubr.f32.mxu0 0.0
    %776 = vmatmul.mubr.f32.gmra.mxu0 %v664
    %v777 = vpop.f32.mrf.mxu0
    %v778 = vadd.f32 %v585, %v777
    %v779 = vpop.f32.mrf.mxu0
    %780 = vmatprep.mubr.f32.mxu0 0.0
    %781 = vmatmul.mubr.f32.gmra.mxu0 %v667
    %v782 = vpop.f32.mrf.mxu0
    %v783 = vadd.f32 %v590, %v782
    %v784 = vpop.f32.mrf.mxu0
    %785 = vmatprep.mubr.f32.mxu0 0.0
    %786 = vmatmul.mubr.f32.gmra.mxu0 %v670
    %v787 = vpop.f32.mrf.mxu0
    %v788 = vadd.f32 %v595, %v787
    %v789 = vpop.f32.mrf.mxu0
    %790 = vmatprep.mubr.f32.mxu0 0.0
    %791 = vmatmul.mubr.f32.gmra.mxu0 %v673
    %v792 = vpop.f32.mrf.mxu0
    %v793 = vadd.f32 %v600, %v792
    %v794 = vpop.f32.mrf.mxu0
    %795 = vmatprep.mubr.f32.mxu0 0.0
    %796 = vmatmul.mubr.f32.gmra.mxu0 %v676
    %v797 = vpop.f32.mrf.mxu0
    %v798 = vadd.f32 %v605, %v797
    %v799 = vpop.f32.mrf.mxu0
    %800 = vmatprep.mubr.f32.mxu0 0.0
    %801 = vmatmul.mubr.f32.gmra.mxu0 %v679
    %v802 = vpop.f32.mrf.mxu0
    %v803 = vadd.f32 %v610, %v802
    %v804 = vpop.f32.mrf.mxu0
    %805 = vmatprep.mubr.f32.mxu0 0.0
    %806 = vmatmul.mubr.f32.gmra.mxu0 %v682
    %v807 = vpop.f32.mrf.mxu0
    %v808 = vadd.f32 %v615, %v807
    %v809 = vpop.f32.mrf.mxu0
    %810 = vmatprep.mubr.f32.mxu0 0.0
    %811 = vmatmul.mubr.f32.gmra.mxu0 %v685
    %v812 = vpop.f32.mrf.mxu0
    %v813 = vadd.f32 %v620, %v812
    %v814 = vpop.f32.mrf.mxu0
    %815 = vmatprep.mubr.f32.mxu0 0.0
    %816 = vmatmul.mubr.f32.gmra.mxu0 %v688
    %v817 = vpop.f32.mrf.mxu0
    %v818 = vadd.f32 %v625, %v817
    %v819 = vpop.f32.mrf.mxu0
    %820 = vmatprep.mubr.f32.mxu0 0.0
    %821 = vmatmul.mubr.f32.gmra.mxu0 %v691
    %v822 = vpop.f32.mrf.mxu0
    %v823 = vadd.f32 %v630, %v822
    %v824 = vpop.f32.mrf.mxu0
    %825 = vmatprep.mubr.f32.mxu0 0.0
    %826 = vmatmul.mubr.f32.gmra.mxu0 %v694
    %v827 = vpop.f32.mrf.mxu0
    %v828 = vadd.f32 %v635, %v827
    %v829 = vpop.f32.mrf.mxu0
    %830 = vmatprep.mubr.f32.mxu0 0.0
    %831 = vmatmul.mubr.f32.gmra.mxu0 %v697
    %v832 = vpop.f32.mrf.mxu0
    %v833 = vadd.f32 %v640, %v832
    %v834 = vpop.f32.mrf.mxu0
    %835 = vmatprep.mubr.f32.mxu0 0.0
    %836 = vmatmul.mubr.f32.gmra.mxu0 %v700
    %v837 = vpop.f32.mrf.mxu0
    %v838 = vadd.f32 %v645, %v837
    %v839 = vpop.f32.mrf.mxu0
    %840 = vmatprep.mubr.f32.mxu0 0.0
    %841 = vmatmul.mubr.f32.gmra.mxu0 %v703
    %v842 = vpop.f32.mrf.mxu0
    %v843 = vadd.f32 %v650, %v842
    %v844 = vpop.f32.mrf.mxu0
    %845 = vmatprep.mubr.f32.mxu0 0.0
    %846 = vmatmul.mubr.f32.gmra.mxu0 %v706
    %v847 = vpop.f32.mrf.mxu0
    %v848 = vadd.f32 %v655, %v847
    %v849 = vpop.f32.mrf.mxu0
    %850 = vmatprep.mubr.f32.mxu0 0.0
    %851 = vmatmul.mubr.f32.gmra.mxu0 %v709
    %v852 = vpop.f32.mrf.mxu0
    %v853 = vadd.f32 %v660, %v852
    %v854 = vpop.f32.mrf.mxu0
    %855 = vdwg.mxu0
    %v856 = vld [vmem:[%s3] sm:$0x1]
    %v858 = vlaneseq
    %v859 = vshrl.u32 %v858, 7
    %v860 = vsub.s32 0, %v859
    %v861 = vrot.slane %v856, %v860
    %v863 = vadd.f32 %v778, %v861
    %v864 = vadd.f32 %v783, %v861
    %v865 = vadd.f32 %v788, %v861
    %v866 = vadd.f32 %v793, %v861
    %v867 = vadd.f32 %v798, %v861
    %v868 = vadd.f32 %v803, %v861
    %v869 = vadd.f32 %v808, %v861
    %v870 = vadd.f32 %v813, %v861
    %v871 = vadd.f32 %v818, %v861
    %v872 = vadd.f32 %v823, %v861
    %v873 = vadd.f32 %v828, %v861
    %v874 = vadd.f32 %v833, %v861
    %v875 = vadd.f32 %v838, %v861
    %v876 = vadd.f32 %v843, %v861
    %v877 = vadd.f32 %v848, %v861
    %v878 = vadd.f32 %v853, %v861
    %879 = vst.msk [vmem:[#allocation2] sm:$0xff] %vm51, %v863
    %880 = vst.msk [vmem:[#allocation2 + $0x8] sm:$0xff] %vm51, %v864
    %881 = vst.msk [vmem:[#allocation2 + $0x10] sm:$0xff] %vm51, %v865
    %882 = vst.msk [vmem:[#allocation2 + $0x18] sm:$0xff] %vm51, %v866
    %883 = vst.msk [vmem:[#allocation2 + $0x20] sm:$0xff] %vm51, %v867
    %884 = vst.msk [vmem:[#allocation2 + $0x28] sm:$0xff] %vm51, %v868
    %885 = vst.msk [vmem:[#allocation2 + $0x30] sm:$0xff] %vm51, %v869
    %886 = vst.msk [vmem:[#allocation2 + $0x38] sm:$0xff] %vm51, %v870
    %887 = vst.msk [vmem:[#allocation2 + $0x40] sm:$0xff] %vm51, %v871
    %888 = vst.msk [vmem:[#allocation2 + $0x48] sm:$0xff] %vm51, %v872
    %889 = vst.msk [vmem:[#allocation2 + $0x50] sm:$0xff] %vm51, %v873
    %890 = vst.msk [vmem:[#allocation2 + $0x58] sm:$0xff] %vm51, %v874
    %891 = vst.msk [vmem:[#allocation2 + $0x60] sm:$0xff] %vm51, %v875
    %892 = vst.msk [vmem:[#allocation2 + $0x68] sm:$0xff] %vm51, %v876
    %893 = vst.msk [vmem:[#allocation2 + $0x70] sm:$0xff] %vm51, %v877
    %894 = vst.msk [vmem:[#allocation2 + $0x78] sm:$0xff] %vm51, %v878
    // Predicated region
    $region18: #{patch_merging_forward.1} parent=1 // pred_check
      _
    $region19: #{patch_merging_forward.1} parent=1 // pred_check_branch
      %896 = sbr.rel (0) target = $region21
    $region20: #{patch_merging_forward.1} parent=1 // pred_region
      %s898 = ssub.s32 2048, 2048
      %899 = vsyncadd [#allocation3], %s898
      %s900 = sshll.u32 [#allocation2], 4
      %s901 = int_to_ptr.vmem [resolvable:$true] %s900
      %906 = dma.vmem_to_hbm [thread:$0]  %s901, 2048, %s4, [#allocation3], 128, 128, 8
    $region21: #{patch_merging_forward.1} parent=1 // pred_fallthru
      _
    // Predicated region
    $region22: #{patch_merging_forward.1} parent=1 // pred_check
      _
    $region23: #{patch_merging_forward.1} parent=1 // pred_check_branch
      %908 = sbr.rel (0) target = $region25
    $region24: #{patch_merging_forward.1} parent=1 // pred_region
      %909 = dma.done [#allocation3], 2048
    $region25: #{patch_merging_forward.1} parent=1 // pred_fallthru
      _
    %910 = vsyncpa [#allocation3], 1

</llo_original>
